<compile_context>
chip_gen: v7x
topology: tpu7x:2x2x1
jax: 0.10.0
libtpu: 0.0.40
codegen_flags: <defaults>
</compile_context>

<pallas_src>
import functools

import jax
import jax.numpy as jnp
import numpy as np
from jax.experimental import pallas as pl
from jax.experimental.pallas import tpu as pltpu

# conv1 contraction dim (9 * angRes) zero-padded to a lane/sublane-clean size.
_K1_PAD = 128


def _fea_extract_kernel(x_ref, w1_ref, w2_ref, gamma_ref, beta_ref, o_ref, *, eps):
    # x_ref:     (K1_PAD, N*H*W)  bf16  nine shifted copies of x (input im2col), zero-pad rows
    # w1_ref:    (9*C, K1_PAD)    bf16  block-diagonal 1x1-conv weight, zero-pad cols
    # w2_ref:    (C, 9*C)         bf16  3x3-conv weight, im2col order (tap-major, c_in minor)
    # gamma_ref: (C, 1)           f32   BN weight
    # beta_ref:  (C, 1)           f32   BN bias
    # o_ref:     (C, N*H*W)       f32   lane-dense output slab

    # conv1 (1x1, no bias) + ReLU on all nine taps at once -> conv2's im2col operand.
    # bf16 operands, f32 accumulation on the MXU, result re-packed to bf16 for conv2.
    im2col = jnp.maximum(
        jnp.dot(w1_ref[...], x_ref[...], preferred_element_type=jnp.float32), 0.0
    ).astype(jnp.bfloat16)

    # conv2 (3x3, pad=1, no bias) as ONE K = 9*C matmul, f32 accumulation.
    f2 = jnp.dot(w2_ref[...], im2col, preferred_element_type=jnp.float32)

    # BatchNorm2d training-mode batch statistics (per channel over N*H*W) + affine + ReLU.
    # Two-pass (mean, then centered variance) avoids E[x^2]-E[x]^2 cancellation.  All f32.
    inv_count = 1.0 / float(f2.shape[1])
    mean = jnp.sum(f2, axis=1, keepdims=True) * inv_count            # (C, 1)
    centered = f2 - mean
    var = jnp.sum(centered * centered, axis=1, keepdims=True) * inv_count
    scale = gamma_ref[...] * jax.lax.rsqrt(var + eps)                # (C, 1)
    o_ref[...] = jnp.maximum(centered * scale + beta_ref[...], 0.0)


def fea_extract_forward(x, w1, w2, gamma, beta, eps=1e-5, out_layout="NCHW"):
    N, A, H, W = x.shape
    C = w1.shape[0]
    NHW = N * H * W
    K1 = 9 * A
    assert K1 <= _K1_PAD, "increase _K1_PAD for this angRes"

    # ---- host-side weight/layout prep (tiny, fused by XLA under jit) ----
    w1_mat = w1.reshape(C, A).astype(jnp.float32)                     # (C, A)
    w1_bd = jnp.kron(jnp.eye(9, dtype=jnp.float32), w1_mat)           # (9C, 9A) block-diag
    w1_bd = jnp.pad(w1_bd, ((0, 0), (0, _K1_PAD - K1))).astype(jnp.bfloat16)   # (9C, 128)
    # (C_out, C_in, kh, kw) -> (C_out, kh, kw, C_in) -> (C, 9C): col idx = (kh*3+kw)*C + c_in
    w2_mat = jnp.transpose(w2, (0, 2, 3, 1)).reshape(C, 9 * C).astype(jnp.bfloat16)

    # im2col of the input: tap t = kh*3+kw holds x[n, a, i+kh-1, j+kw-1] (zero padded),
    # flattened lane-dense to (K1_PAD, N*H*W) in bf16.  Spatial shifts commute with the
    # bias-free per-pixel 1x1 conv + ReLU, so this equals shifting relu(conv1(x)) in-kernel.
    xt = jnp.transpose(x, (1, 0, 2, 3)).astype(jnp.bfloat16)          # (A, N, H, W)
    xp = jnp.pad(xt, ((0, 0), (0, 0), (1, 1), (1, 1)))                # (A, N, H+2, W+2)
    x_stack = jnp.concatenate(
        [xp[:, :, kh:kh + H, kw:kw + W] for kh in range(3) for kw in range(3)],
        axis=0).reshape(K1, NHW)                                      # (9A, NHW)
    x_stack = jnp.pad(x_stack, ((0, _K1_PAD - K1), (0, 0)))           # (128, NHW)

    kernel = functools.partial(_fea_extract_kernel, eps=float(eps))

    bytes_in = (_K1_PAD * NHW + 9 * C * _K1_PAD + C * 9 * C) * 2 + 2 * C * 4
    cost = pl.CostEstimate(
        flops=2 * NHW * (9 * C * _K1_PAD + C * 9 * C) + 8 * C * NHW,
        transcendentals=C,
        bytes_accessed=bytes_in + C * NHW * 4,
    )

    out_flat = pl.pallas_call(
        kernel,
        out_shape=jax.ShapeDtypeStruct((C, NHW), jnp.float32),
        # Single grid step: fused problem is < 1 MiB of VMEM; latency/fixed-overhead bound.
        # TODO(synk): if NHW or C grows, tile the NHW (lane) axis as a "parallel" grid axis
        # with a two-phase BN (per-tile partial sum / sum-of-squares, then finalize) so the
        # second v7x TensorCore is used; re-budget tiles against v7x's 64 MiB VMEM
        # (BlockSpec double-buffers: 2x(x tile) + 2x(out tile) + weights + (9C, tile) temp).
        grid=(1,),
        in_specs=[
            pl.BlockSpec((_K1_PAD, NHW), lambda i: (0, 0)),
            pl.BlockSpec((9 * C, _K1_PAD), lambda i: (0, 0)),
            pl.BlockSpec((C, 9 * C), lambda i: (0, 0)),
            pl.BlockSpec((C, 1), lambda i: (0, 0)),
            pl.BlockSpec((C, 1), lambda i: (0, 0)),
        ],
        out_specs=pl.BlockSpec((C, NHW), lambda i: (0, 0)),
        compiler_params=pltpu.CompilerParams(
            dimension_semantics=("arbitrary",),
            vmem_limit_bytes=4 * 1024 * 1024,
        ),
        cost_estimate=cost,
    )(x_stack, w1_bd, w2_mat,
      gamma.reshape(C, 1).astype(jnp.float32),
      beta.reshape(C, 1).astype(jnp.float32))

    # TODO(synk): BatchNorm2d running_mean/running_var update (training side effect) is not
    # emitted; the forward output matches the train-mode module.
    if out_layout == "C_NHW":
        # Fusion-friendly lane-dense slab for channels-last consumers (skips the transpose).
        return out_flat
    return jnp.transpose(out_flat.reshape(C, N, H, W), (1, 0, 2, 3))


def fea_extract_ref(x, w1, w2, gamma, beta, eps=1e-5):
    """Pure-JAX f32 reference matching the PyTorch module (training-mode BN)."""
    dn = ('NCHW', 'OIHW', 'NCHW')
    f1 = jax.lax.conv_general_dilated(x, w1, (1, 1), 'VALID', dimension_numbers=dn)
    f1 = jnp.maximum(f1, 0.0)
    f2 = jax.lax.conv_general_dilated(f1, w2, (1, 1), ((1, 1), (1, 1)),
                                      dimension_numbers=dn)
    mean = jnp.mean(f2, axis=(0, 2, 3))
    var = jnp.var(f2, axis=(0, 2, 3))
    yhat = (f2 - mean[None, :, None, None]) / jnp.sqrt(var[None, :, None, None] + eps)
    out = yhat * gamma[None, :, None, None] + beta[None, :, None, None]
    return jnp.maximum(out, 0.0)


if __name__ == "__main__":
    N, angRes, channel, H, W = 2, 4, 32, 16, 16

    key = jax.random.PRNGKey(0)
    kx, k1, k2 = jax.random.split(key, 3)
    x = jax.random.normal(kx, (N, angRes, H, W), jnp.float32)
    # PyTorch conv weight shapes: (out, in, kH, kW), no bias
    w1 = jax.random.normal(k1, (channel, angRes, 1, 1), jnp.float32) / np.sqrt(angRes)
    w2 = jax.random.normal(k2, (channel, channel, 3, 3), jnp.float32) / np.sqrt(channel * 9)
    gamma = jnp.ones((channel,), jnp.float32)   # BatchNorm2d default weight
    beta = jnp.zeros((channel,), jnp.float32)   # BatchNorm2d default bias

    out = jax.jit(fea_extract_forward)(x, w1, w2, gamma, beta)
    out = jax.block_until_ready(out)

    ref = fea_extract_ref(x, w1, w2, gamma, beta)
    # bf16 MXU operands with f32 accumulation -> ~1% relative error post-BN.
    np.testing.assert_allclose(np.asarray(out), np.asarray(ref), rtol=3e-2, atol=3e-2)
    print("KERNEL_OK")
</pallas_src>

<mosaic_0001>
module attributes {stable_mosaic.version = 11 : i64} {
  func.func @_fea_extract_kernel(%arg0: i32, %arg1: memref<128x512xbf16, #tpu.memory_space<vmem>>, %arg2: memref<288x128xbf16, #tpu.memory_space<vmem>>, %arg3: memref<32x288xbf16, #tpu.memory_space<vmem>>, %arg4: memref<32x1xf32, #tpu.memory_space<vmem>>, %arg5: memref<32x1xf32, #tpu.memory_space<vmem>>, %arg6: memref<32x512xf32, #tpu.memory_space<vmem>>) attributes {dimension_semantics = [#tpu.dimension_semantics<arbitrary>], iteration_bounds = array<i64: 1>, scalar_prefetch = 0 : i64, scratch_operands = 0 : i64, tpu.core_type = #tpu.core_type<tc>, window_params = [{pipeline_mode = #tpu.pipeline_mode<synchronous>, transform_indices = @transform_0, window_bounds = array<i64: 128, 512>}, {pipeline_mode = #tpu.pipeline_mode<synchronous>, transform_indices = @transform_1, window_bounds = array<i64: 288, 128>}, {pipeline_mode = #tpu.pipeline_mode<synchronous>, transform_indices = @transform_2, window_bounds = array<i64: 32, 288>}, {pipeline_mode = #tpu.pipeline_mode<synchronous>, transform_indices = @transform_3, window_bounds = array<i64: 32, 1>}, {pipeline_mode = #tpu.pipeline_mode<synchronous>, transform_indices = @transform_4, window_bounds = array<i64: 32, 1>}, {pipeline_mode = #tpu.pipeline_mode<synchronous>, transform_indices = @transform_5, window_bounds = array<i64: 32, 512>}]} {
    %c0 = arith.constant 0 : index
    %c0_0 = arith.constant 0 : index
    %0 = vector.load %arg2[%c0, %c0_0] : memref<288x128xbf16, #tpu.memory_space<vmem>>, vector<288x128xbf16>
    %c0_1 = arith.constant 0 : index
    %c0_2 = arith.constant 0 : index
    %1 = vector.load %arg1[%c0_1, %c0_2] : memref<128x512xbf16, #tpu.memory_space<vmem>>, vector<128x512xbf16>
    %cst = arith.constant dense<0.000000e+00> : vector<288x512xf32>
    %2 = tpu.matmul %0, %1, %cst {dimension_numbers = #tpu.dot_dimension_numbers<[1], [0], [0], [1], [0, 0, 1, 1], [], []>} : vector<288x128xbf16>, vector<128x512xbf16>, vector<288x512xf32> -> vector<288x512xf32>
    %cst_3 = arith.constant 0.000000e+00 : f32
    %3 = vector.broadcast %cst_3 : f32 to vector<288x512xf32>
    %4 = arith.maximumf %2, %3 : vector<288x512xf32>
    %5 = arith.truncf %4 : vector<288x512xf32> to vector<288x512xbf16>
    %c0_4 = arith.constant 0 : index
    %c0_5 = arith.constant 0 : index
    %6 = vector.load %arg3[%c0_4, %c0_5] : memref<32x288xbf16, #tpu.memory_space<vmem>>, vector<32x288xbf16>
    %cst_6 = arith.constant dense<0.000000e+00> : vector<32x512xf32>
    %7 = tpu.matmul %6, %5, %cst_6 {dimension_numbers = #tpu.dot_dimension_numbers<[1], [0], [0], [1], [0, 0, 1, 1], [], []>} : vector<32x288xbf16>, vector<288x512xbf16>, vector<32x512xf32> -> vector<32x512xf32>
    %cst_7 = arith.constant dense<0.000000e+00> : vector<32xf32>
    %8 = vector.multi_reduction <add>, %7, %cst_7 [1] : vector<32x512xf32> to vector<32xf32>
    %9 = vector.shape_cast %8 : vector<32xf32> to vector<32x1xf32>
    %cst_8 = arith.constant 0.001953125 : f32
    %10 = vector.broadcast %cst_8 : f32 to vector<32x1xf32>
    %11 = arith.mulf %9, %10 : vector<32x1xf32>
    %12 = vector.broadcast %11 : vector<32x1xf32> to vector<32x512xf32>
    %13 = arith.subf %7, %12 : vector<32x512xf32>
    %14 = arith.mulf %13, %13 : vector<32x512xf32>
    %cst_9 = arith.constant dense<0.000000e+00> : vector<32xf32>
    %15 = vector.multi_reduction <add>, %14, %cst_9 [1] : vector<32x512xf32> to vector<32xf32>
    %16 = vector.shape_cast %15 : vector<32xf32> to vector<32x1xf32>
    %cst_10 = arith.constant 0.001953125 : f32
    %17 = vector.broadcast %cst_10 : f32 to vector<32x1xf32>
    %18 = arith.mulf %16, %17 : vector<32x1xf32>
    %c0_11 = arith.constant 0 : index
    %c0_12 = arith.constant 0 : index
    %19 = vector.load %arg4[%c0_11, %c0_12] : memref<32x1xf32, #tpu.memory_space<vmem>>, vector<32x1xf32>
    %cst_13 = arith.constant 9.99999974E-6 : f32
    %20 = vector.broadcast %cst_13 : f32 to vector<32x1xf32>
    %21 = arith.addf %18, %20 : vector<32x1xf32>
    %22 = math.rsqrt %21 : vector<32x1xf32>
    %23 = arith.mulf %19, %22 : vector<32x1xf32>
    %24 = vector.broadcast %23 : vector<32x1xf32> to vector<32x512xf32>
    %25 = arith.mulf %13, %24 : vector<32x512xf32>
    %c0_14 = arith.constant 0 : index
    %c0_15 = arith.constant 0 : index
    %26 = vector.load %arg5[%c0_14, %c0_15] : memref<32x1xf32, #tpu.memory_space<vmem>>, vector<32x1xf32>
    %27 = vector.broadcast %26 : vector<32x1xf32> to vector<32x512xf32>
    %28 = arith.addf %25, %27 : vector<32x512xf32>
    %cst_16 = arith.constant 0.000000e+00 : f32
    %29 = vector.broadcast %cst_16 : f32 to vector<32x512xf32>
    %30 = arith.maximumf %28, %29 : vector<32x512xf32>
    %c0_17 = arith.constant 0 : index
    %c0_18 = arith.constant 0 : index
    %31 = vector.load %arg6[%c0_17, %c0_18] : memref<32x512xf32, #tpu.memory_space<vmem>>, vector<32x512xf32>
    tpu.vector_store %arg6[%c0_17, %c0_18], %30 {strides = array<i32>} : memref<32x512xf32, #tpu.memory_space<vmem>>, vector<32x512xf32>,
    return
  }
  func.func @transform_0(%arg0: i32) -> (i32, i32) {
    %c0_i32 = arith.constant 0 : i32
    %c0_i32_0 = arith.constant 0 : i32
    %c0_i32_1 = arith.constant 0 : i32
    return %c0_i32, %c0_i32_0 : i32, i32
  }
  func.func @transform_1(%arg0: i32) -> (i32, i32) {
    %c0_i32 = arith.constant 0 : i32
    %c0_i32_0 = arith.constant 0 : i32
    %c0_i32_1 = arith.constant 0 : i32
    return %c0_i32, %c0_i32_0 : i32, i32
  }
  func.func @transform_2(%arg0: i32) -> (i32, i32) {
    %c0_i32 = arith.constant 0 : i32
    %c0_i32_0 = arith.constant 0 : i32
    %c0_i32_1 = arith.constant 0 : i32
    return %c0_i32, %c0_i32_0 : i32, i32
  }
  func.func @transform_3(%arg0: i32) -> (i32, i32) {
    %c0_i32 = arith.constant 0 : i32
    %c0_i32_0 = arith.constant 0 : i32
    %c0_i32_1 = arith.constant 0 : i32
    return %c0_i32, %c0_i32_0 : i32, i32
  }
  func.func @transform_4(%arg0: i32) -> (i32, i32) {
    %c0_i32 = arith.constant 0 : i32
    %c0_i32_0 = arith.constant 0 : i32
    %c0_i32_1 = arith.constant 0 : i32
    return %c0_i32, %c0_i32_0 : i32, i32
  }
  func.func @transform_5(%arg0: i32) -> (i32, i32) {
    %c0_i32 = arith.constant 0 : i32
    %c0_i32_0 = arith.constant 0 : i32
    %c0_i32_1 = arith.constant 0 : i32
    return %c0_i32, %c0_i32_0 : i32, i32
  }
}

</mosaic_0001>

<llo_original>
// kernel: fea_extract_forward.1
$region0: #{fea_extract_forward.1}
  #allocation0 [shape = 'u32[]', space=smem, size = 0x4, offset = 0x4, fixed_abs, tag = 'smem constant byte address 0x4 - core index']
  #allocation1 [shape = 'u32[144,128]{1,0:T(1,128)}', space=vmem, size = 0x12000, scoped, tag = 'internal scratch']
  %s0 = inlined_call_operand.vmem [shape: bf16[128,512], index: 0, kind: input, shape index: {}]
  %s1 = inlined_call_operand.vmem [shape: bf16[288,128], index: 1, kind: input, shape index: {}]
  %s2 = inlined_call_operand.vmem [shape: bf16[32,288], index: 2, kind: input, shape index: {}]
  %s3 = inlined_call_operand.vmem [shape: f32[32,1], index: 3, kind: input, shape index: {}]
  %s4 = inlined_call_operand.vmem [shape: f32[32,1], index: 4, kind: input, shape index: {}]
  %s5 = inlined_call_operand.vmem [shape: f32[32,512], index: 5, kind: output, shape index: {}]
  %s6 = sld [smem:[#allocation0]]
  $region30: #{fea_extract_forward.1} parent=0
    _
  %s8 = ssub.s32 1, %s6
  %s9 = scalar_select 0, %s8, %s6
  // Predicated region
  $region2: #{fea_extract_forward.1} parent=0 // pred_check
    _
  $region3: #{fea_extract_forward.1} parent=0 // pred_check_branch
    %11 = sbr.rel (0) target = $region5
  $region4: #{fea_extract_forward.1} parent=0 // pred_region
    _
  $region5: #{fea_extract_forward.1} parent=0 // pred_fallthru
    _
  // Predicated region
  $region6: #{fea_extract_forward.1} parent=0 // pred_check
    _
  $region7: #{fea_extract_forward.1} parent=0 // pred_check_branch
    %13 = sbr.rel (0) target = $region9
  $region8: #{fea_extract_forward.1} parent=0 // pred_region
    _
  $region9: #{fea_extract_forward.1} parent=0 // pred_fallthru
    _
  // Predicated region
  $region10: #{fea_extract_forward.1} parent=0 // pred_check
    _
  $region11: #{fea_extract_forward.1} parent=0 // pred_check_branch
    %15 = sbr.rel (0) target = $region13
  $region12: #{fea_extract_forward.1} parent=0 // pred_region
    _
  $region13: #{fea_extract_forward.1} parent=0 // pred_fallthru
    _
  // Predicated region
  $region14: #{fea_extract_forward.1} parent=0 // pred_check
    _
  $region15: #{fea_extract_forward.1} parent=0 // pred_check_branch
    %17 = sbr.rel (0) target = $region17
  $region16: #{fea_extract_forward.1} parent=0 // pred_region
    _
  $region17: #{fea_extract_forward.1} parent=0 // pred_fallthru
    _
  // Predicated region
  $region18: #{fea_extract_forward.1} parent=0 // pred_check
    _
  $region19: #{fea_extract_forward.1} parent=0 // pred_check_branch
    %19 = sbr.rel (0) target = $region21
  $region20: #{fea_extract_forward.1} parent=0 // pred_region
    _
  $region21: #{fea_extract_forward.1} parent=0 // pred_fallthru
    _
  %v21 = vld [vmem:[%s1] sm:$0xf]
  %v22 = vld [vmem:[%s1 + $0x4] sm:$0xf]
  %v23 = vld [vmem:[%s1 + $0x8] sm:$0xf]
  %v24 = vld [vmem:[%s1 + $0xc] sm:$0xf]
  %v25 = vld [vmem:[%s1 + $0x10] sm:$0xf]
  %v26 = vld [vmem:[%s1 + $0x14] sm:$0xf]
  %v27 = vld [vmem:[%s1 + $0x18] sm:$0xf]
  %v28 = vld [vmem:[%s1 + $0x1c] sm:$0xf]
  %v29 = vld [vmem:[%s1 + $0x20] sm:$0xf]
  %v30 = vld [vmem:[%s1 + $0x24] sm:$0xf]
  %v31 = vld [vmem:[%s1 + $0x28] sm:$0xf]
  %v32 = vld [vmem:[%s1 + $0x2c] sm:$0xf]
  %v33 = vld [vmem:[%s1 + $0x30] sm:$0xf]
  %v34 = vld [vmem:[%s1 + $0x34] sm:$0xf]
  %v35 = vld [vmem:[%s1 + $0x38] sm:$0xf]
  %v36 = vld [vmem:[%s1 + $0x3c] sm:$0xf]
  %v37 = vld [vmem:[%s1 + $0x40] sm:$0xf]
  %v38 = vld [vmem:[%s1 + $0x44] sm:$0xf]
  %v39 = vld [vmem:[%s1 + $0x48] sm:$0xf]
  %v40 = vld [vmem:[%s1 + $0x4c] sm:$0xf]
  %v41 = vld [vmem:[%s1 + $0x50] sm:$0xf]
  %v42 = vld [vmem:[%s1 + $0x54] sm:$0xf]
  %v43 = vld [vmem:[%s1 + $0x58] sm:$0xf]
  %v44 = vld [vmem:[%s1 + $0x5c] sm:$0xf]
  %v45 = vld [vmem:[%s1 + $0x60] sm:$0xf]
  %v46 = vld [vmem:[%s1 + $0x64] sm:$0xf]
  %v47 = vld [vmem:[%s1 + $0x68] sm:$0xf]
  %v48 = vld [vmem:[%s1 + $0x6c] sm:$0xf]
  %v49 = vld [vmem:[%s1 + $0x70] sm:$0xf]
  %v50 = vld [vmem:[%s1 + $0x74] sm:$0xf]
  %v51 = vld [vmem:[%s1 + $0x78] sm:$0xf]
  %v52 = vld [vmem:[%s1 + $0x7c] sm:$0xf]
  %v53 = vld [vmem:[%s1 + $0x80] sm:$0xf]
  %v54 = vld [vmem:[%s1 + $0x84] sm:$0xf]
  %v55 = vld [vmem:[%s1 + $0x88] sm:$0xf]
  %v56 = vld [vmem:[%s1 + $0x8c] sm:$0xf]
  %v57 = vld [vmem:[%s0] sm:$0xff]
  %v58 = vld [vmem:[%s0 + $0x8] sm:$0xff]
  %v59 = vld [vmem:[%s0 + $0x10] sm:$0xff]
  %v60 = vld [vmem:[%s0 + $0x18] sm:$0xff]
  %v61 = vld [vmem:[%s0 + $0x20] sm:$0xff]
  %v62 = vld [vmem:[%s0 + $0x28] sm:$0xff]
  %v63 = vld [vmem:[%s0 + $0x30] sm:$0xff]
  %v64 = vld [vmem:[%s0 + $0x38] sm:$0xff]
  %v65 = vld [vmem:[%s0 + $0x40] sm:$0xff]
  %v66 = vld [vmem:[%s0 + $0x48] sm:$0xff]
  %v67 = vld [vmem:[%s0 + $0x50] sm:$0xff]
  %v68 = vld [vmem:[%s0 + $0x58] sm:$0xff]
  %v69 = vld [vmem:[%s0 + $0x60] sm:$0xff]
  %v70 = vld [vmem:[%s0 + $0x68] sm:$0xff]
  %v71 = vld [vmem:[%s0 + $0x70] sm:$0xff]
  %v72 = vld [vmem:[%s0 + $0x78] sm:$0xff]
  %v73 = vld [vmem:[%s0 + $0x80] sm:$0xff]
  %v74 = vld [vmem:[%s0 + $0x88] sm:$0xff]
  %v75 = vld [vmem:[%s0 + $0x90] sm:$0xff]
  %v76 = vld [vmem:[%s0 + $0x98] sm:$0xff]
  %v77 = vld [vmem:[%s0 + $0xa0] sm:$0xff]
  %v78 = vld [vmem:[%s0 + $0xa8] sm:$0xff]
  %v79 = vld [vmem:[%s0 + $0xb0] sm:$0xff]
  %v80 = vld [vmem:[%s0 + $0xb8] sm:$0xff]
  %v81 = vld [vmem:[%s0 + $0xc0] sm:$0xff]
  %v82 = vld [vmem:[%s0 + $0xc8] sm:$0xff]
  %v83 = vld [vmem:[%s0 + $0xd0] sm:$0xff]
  %v84 = vld [vmem:[%s0 + $0xd8] sm:$0xff]
  %v85 = vld [vmem:[%s0 + $0xe0] sm:$0xff]
  %v86 = vld [vmem:[%s0 + $0xe8] sm:$0xff]
  %v87 = vld [vmem:[%s0 + $0xf0] sm:$0xff]
  %v88 = vld [vmem:[%s0 + $0xf8] sm:$0xff]
  %v125 = vunpack.c.l.b16 %v21
  %v126 = vunpack.c.l.b16 %v22
  %v127 = vunpack.c.l.b16 %v23
  %v128 = vunpack.c.l.b16 %v24
  %v129 = vunpack.c.l.b16 %v25
  %v130 = vunpack.c.l.b16 %v26
  %v131 = vunpack.c.l.b16 %v27
  %v132 = vunpack.c.l.b16 %v28
  %v133 = vunpack.c.l.b16 %v29
  %v134 = vunpack.c.l.b16 %v30
  %v135 = vunpack.c.l.b16 %v31
  %v136 = vunpack.c.l.b16 %v32
  %v137 = vunpack.c.l.b16 %v33
  %v138 = vunpack.c.l.b16 %v34
  %v139 = vunpack.c.l.b16 %v35
  %v140 = vunpack.c.l.b16 %v36
  %v141 = vunpack.c.l.b16 %v37
  %v142 = vunpack.c.l.b16 %v38
  %v143 = vunpack.c.l.b16 %v39
  %v144 = vunpack.c.l.b16 %v40
  %v145 = vunpack.c.l.b16 %v41
  %v146 = vunpack.c.l.b16 %v42
  %v147 = vunpack.c.l.b16 %v43
  %v148 = vunpack.c.l.b16 %v44
  %v149 = vunpack.c.l.b16 %v45
  %v150 = vunpack.c.l.b16 %v46
  %v151 = vunpack.c.l.b16 %v47
  %v152 = vunpack.c.l.b16 %v48
  %v153 = vunpack.c.l.b16 %v49
  %v154 = vunpack.c.l.b16 %v50
  %v155 = vunpack.c.l.b16 %v51
  %v156 = vunpack.c.l.b16 %v52
  %v157 = vunpack.c.l.b16 %v53
  %v158 = vunpack.c.l.b16 %v54
  %v159 = vunpack.c.l.b16 %v55
  %v160 = vunpack.c.l.b16 %v56
  %v161 = vpack.c.b16 %v126, %v125
  %v162 = vpack.c.b16 %v128, %v127
  %v163 = vpack.c.b16 %v130, %v129
  %v164 = vpack.c.b16 %v132, %v131
  %v165 = vpack.c.b16 %v134, %v133
  %v166 = vpack.c.b16 %v136, %v135
  %v167 = vpack.c.b16 %v138, %v137
  %v168 = vpack.c.b16 %v140, %v139
  %v169 = vpack.c.b16 %v142, %v141
  %v170 = vpack.c.b16 %v144, %v143
  %v171 = vpack.c.b16 %v146, %v145
  %v172 = vpack.c.b16 %v148, %v147
  %v173 = vpack.c.b16 %v150, %v149
  %v174 = vpack.c.b16 %v152, %v151
  %v175 = vpack.c.b16 %v154, %v153
  %v176 = vpack.c.b16 %v156, %v155
  %v177 = vpack.c.b16 %v158, %v157
  %v178 = vpack.c.b16 %v160, %v159
  %v229 = vunpack.c.l.b16 %v57
  %v230 = vunpack.c.h.b16 %v57
  %v231 = vunpack.c.l.b16 %v58
  %v232 = vunpack.c.h.b16 %v58
  %v233 = vunpack.c.l.b16 %v59
  %v234 = vunpack.c.h.b16 %v59
  %v235 = vunpack.c.l.b16 %v60
  %v236 = vunpack.c.h.b16 %v60
  %v237 = vunpack.c.l.b16 %v61
  %v238 = vunpack.c.h.b16 %v61
  %v239 = vunpack.c.l.b16 %v62
  %v240 = vunpack.c.h.b16 %v62
  %v241 = vunpack.c.l.b16 %v63
  %v242 = vunpack.c.h.b16 %v63
  %v243 = vunpack.c.l.b16 %v64
  %v244 = vunpack.c.h.b16 %v64
  %v245 = vunpack.c.l.b16 %v65
  %v246 = vunpack.c.h.b16 %v65
  %v247 = vunpack.c.l.b16 %v66
  %v248 = vunpack.c.h.b16 %v66
  %v249 = vunpack.c.l.b16 %v67
  %v250 = vunpack.c.h.b16 %v67
  %v251 = vunpack.c.l.b16 %v68
  %v252 = vunpack.c.h.b16 %v68
  %v253 = vunpack.c.l.b16 %v69
  %v254 = vunpack.c.h.b16 %v69
  %v255 = vunpack.c.l.b16 %v70
  %v256 = vunpack.c.h.b16 %v70
  %v257 = vunpack.c.l.b16 %v71
  %v258 = vunpack.c.h.b16 %v71
  %v259 = vunpack.c.l.b16 %v72
  %v260 = vunpack.c.h.b16 %v72
  %v261 = vunpack.c.l.b16 %v73
  %v262 = vunpack.c.h.b16 %v73
  %v263 = vunpack.c.l.b16 %v74
  %v264 = vunpack.c.h.b16 %v74
  %v265 = vunpack.c.l.b16 %v75
  %v266 = vunpack.c.h.b16 %v75
  %v267 = vunpack.c.l.b16 %v76
  %v268 = vunpack.c.h.b16 %v76
  %v269 = vunpack.c.l.b16 %v77
  %v270 = vunpack.c.h.b16 %v77
  %v271 = vunpack.c.l.b16 %v78
  %v272 = vunpack.c.h.b16 %v78
  %v273 = vunpack.c.l.b16 %v79
  %v274 = vunpack.c.h.b16 %v79
  %v275 = vunpack.c.l.b16 %v80
  %v276 = vunpack.c.h.b16 %v80
  %v277 = vunpack.c.l.b16 %v81
  %v278 = vunpack.c.h.b16 %v81
  %v279 = vunpack.c.l.b16 %v82
  %v280 = vunpack.c.h.b16 %v82
  %v281 = vunpack.c.l.b16 %v83
  %v282 = vunpack.c.h.b16 %v83
  %v283 = vunpack.c.l.b16 %v84
  %v284 = vunpack.c.h.b16 %v84
  %v285 = vunpack.c.l.b16 %v85
  %v286 = vunpack.c.h.b16 %v85
  %v287 = vunpack.c.l.b16 %v86
  %v288 = vunpack.c.h.b16 %v86
  %v289 = vunpack.c.l.b16 %v87
  %v290 = vunpack.c.h.b16 %v87
  %v291 = vunpack.c.l.b16 %v88
  %v292 = vunpack.c.h.b16 %v88
  %v293 = vpack.c.b16 %v233, %v229
  %v294 = vpack.c.b16 %v234, %v230
  %v295 = vpack.c.b16 %v235, %v231
  %v296 = vpack.c.b16 %v236, %v232
  %v297 = vpack.c.b16 %v241, %v237
  %v298 = vpack.c.b16 %v242, %v238
  %v299 = vpack.c.b16 %v243, %v239
  %v300 = vpack.c.b16 %v244, %v240
  %v301 = vpack.c.b16 %v249, %v245
  %v302 = vpack.c.b16 %v250, %v246
  %v303 = vpack.c.b16 %v251, %v247
  %v304 = vpack.c.b16 %v252, %v248
  %v305 = vpack.c.b16 %v257, %v253
  %v306 = vpack.c.b16 %v258, %v254
  %v307 = vpack.c.b16 %v259, %v255
  %v308 = vpack.c.b16 %v260, %v256
  %v309 = vpack.c.b16 %v265, %v261
  %v310 = vpack.c.b16 %v266, %v262
  %v311 = vpack.c.b16 %v267, %v263
  %v312 = vpack.c.b16 %v268, %v264
  %v313 = vpack.c.b16 %v273, %v269
  %v314 = vpack.c.b16 %v274, %v270
  %v315 = vpack.c.b16 %v275, %v271
  %v316 = vpack.c.b16 %v276, %v272
  %v317 = vpack.c.b16 %v281, %v277
  %v318 = vpack.c.b16 %v282, %v278
  %v319 = vpack.c.b16 %v283, %v279
  %v320 = vpack.c.b16 %v284, %v280
  %v321 = vpack.c.b16 %v289, %v285
  %v322 = vpack.c.b16 %v290, %v286
  %v323 = vpack.c.b16 %v291, %v287
  %v324 = vpack.c.b16 %v292, %v288
  %357 = vmatprep.subr.bf16.mxu0 %v294
  %358 = vmatpush1.bf16.msra.mxu0 %v293
  %359 = vmatprep.subr.bf16.mxu0 %v298
  %360 = vmatpush1.bf16.msra.mxu0 %v297
  %361 = vmatprep.subr.bf16.mxu0 %v302
  %362 = vmatpush1.bf16.msra.mxu0 %v301
  %363 = vmatprep.subr.bf16.mxu0 %v306
  %364 = vmatpush1.bf16.msra.mxu0 %v305
  %365 = vmatprep.subr.bf16.mxu0 %v310
  %366 = vmatpush1.bf16.msra.mxu0 %v309
  %367 = vmatprep.subr.bf16.mxu0 %v314
  %368 = vmatpush1.bf16.msra.mxu0 %v313
  %369 = vmatprep.subr.bf16.mxu0 %v318
  %370 = vmatpush1.bf16.msra.mxu0 %v317
  %371 = vmatprep.subr.bf16.mxu0 %v322
  %372 = vmatpush1.bf16.msra.mxu0 %v321
  %373 = vmatprep.subr.bf16.mxu0 0
  %374 = vmatpush1.bf16.msra.mxu0 0
  %375 = vmatprep.subr.bf16.mxu0 0
  %376 = vmatpush1.bf16.msra.mxu0 0
  %377 = vmatprep.subr.bf16.mxu0 0
  %378 = vmatpush1.bf16.msra.mxu0 0
  %379 = vmatprep.subr.bf16.mxu0 0
  %380 = vmatpush1.bf16.msra.mxu0 0
  %381 = vmatprep.subr.bf16.mxu0 0
  %382 = vmatpush1.bf16.msra.mxu0 0
  %383 = vmatprep.subr.bf16.mxu0 0
  %384 = vmatpush1.bf16.msra.mxu0 0
  %385 = vmatprep.subr.bf16.mxu0 0
  %386 = vmatpush1.bf16.msra.mxu0 0
  %387 = vmatprep.subr.bf16.mxu0 0
  %388 = vmatpush1.bf16.msra.mxu0 0
  %389 = vmatprep.mubr.bf16.mxu0 0
  %390 = vmatmul.mubr.bf16.gmra.mrb[0].mxu0 %v161
  %v391 = vpop.f32.mrb[0].mxu0
  %v392 = vadd.f32 0.0, %v391
  %v393 = vpop.f32.mrb[0].mxu0
  %v394 = vadd.f32 0.0, %v393
  %v395 = vpop.f32.mrb[0].mxu0
  %v396 = vadd.f32 0.0, %v395
  %v397 = vpop.f32.mrb[0].mxu0
  %v398 = vadd.f32 0.0, %v397
  %399 = vmatprep.mubr.bf16.mxu0 0
  %400 = vmatmul.mubr.bf16.gmra.mrb[0].mxu0 %v162
  %v401 = vpop.f32.mrb[0].mxu0
  %v402 = vadd.f32 0.0, %v401
  %v403 = vpop.f32.mrb[0].mxu0
  %v404 = vadd.f32 0.0, %v403
  %v405 = vpop.f32.mrb[0].mxu0
  %v406 = vadd.f32 0.0, %v405
  %v407 = vpop.f32.mrb[0].mxu0
  %v408 = vadd.f32 0.0, %v407
  %409 = vmatprep.mubr.bf16.mxu0 0
  %410 = vmatmul.mubr.bf16.gmra.mrb[0].mxu0 %v163
  %v411 = vpop.f32.mrb[0].mxu0
  %v412 = vadd.f32 0.0, %v411
  %v413 = vpop.f32.mrb[0].mxu0
  %v414 = vadd.f32 0.0, %v413
  %v415 = vpop.f32.mrb[0].mxu0
  %v416 = vadd.f32 0.0, %v415
  %v417 = vpop.f32.mrb[0].mxu0
  %v418 = vadd.f32 0.0, %v417
  %419 = vmatprep.mubr.bf16.mxu0 0
  %420 = vmatmul.mubr.bf16.gmra.mrb[0].mxu0 %v164
  %v421 = vpop.f32.mrb[0].mxu0
  %v422 = vadd.f32 0.0, %v421
  %v423 = vpop.f32.mrb[0].mxu0
  %v424 = vadd.f32 0.0, %v423
  %v425 = vpop.f32.mrb[0].mxu0
  %v426 = vadd.f32 0.0, %v425
  %v427 = vpop.f32.mrb[0].mxu0
  %v428 = vadd.f32 0.0, %v427
  %429 = vmatprep.mubr.bf16.mxu0 0
  %430 = vmatmul.mubr.bf16.gmra.mrb[0].mxu0 %v165
  %v431 = vpop.f32.mrb[0].mxu0
  %v432 = vadd.f32 0.0, %v431
  %v433 = vpop.f32.mrb[0].mxu0
  %v434 = vadd.f32 0.0, %v433
  %v435 = vpop.f32.mrb[0].mxu0
  %v436 = vadd.f32 0.0, %v435
  %v437 = vpop.f32.mrb[0].mxu0
  %v438 = vadd.f32 0.0, %v437
  %439 = vmatprep.mubr.bf16.mxu0 0
  %440 = vmatmul.mubr.bf16.gmra.mrb[0].mxu0 %v166
  %v441 = vpop.f32.mrb[0].mxu0
  %v442 = vadd.f32 0.0, %v441
  %v443 = vpop.f32.mrb[0].mxu0
  %v444 = vadd.f32 0.0, %v443
  %v445 = vpop.f32.mrb[0].mxu0
  %v446 = vadd.f32 0.0, %v445
  %v447 = vpop.f32.mrb[0].mxu0
  %v448 = vadd.f32 0.0, %v447
  %449 = vmatprep.mubr.bf16.mxu0 0
  %450 = vmatmul.mubr.bf16.gmra.mrb[0].mxu0 %v167
  %v451 = vpop.f32.mrb[0].mxu0
  %v452 = vadd.f32 0.0, %v451
  %v453 = vpop.f32.mrb[0].mxu0
  %v454 = vadd.f32 0.0, %v453
  %v455 = vpop.f32.mrb[0].mxu0
  %v456 = vadd.f32 0.0, %v455
  %v457 = vpop.f32.mrb[0].mxu0
  %v458 = vadd.f32 0.0, %v457
  %459 = vmatprep.mubr.bf16.mxu0 0
  %460 = vmatmul.mubr.bf16.gmra.mrb[0].mxu0 %v168
  %v461 = vpop.f32.mrb[0].mxu0
  %v462 = vadd.f32 0.0, %v461
  %v463 = vpop.f32.mrb[0].mxu0
  %v464 = vadd.f32 0.0, %v463
  %v465 = vpop.f32.mrb[0].mxu0
  %v466 = vadd.f32 0.0, %v465
  %v467 = vpop.f32.mrb[0].mxu0
  %v468 = vadd.f32 0.0, %v467
  %469 = vmatprep.mubr.bf16.mxu0 0
  %470 = vmatmul.mubr.bf16.gmra.mrb[0].mxu0 %v169
  %v471 = vpop.f32.mrb[0].mxu0
  %v472 = vadd.f32 0.0, %v471
  %v473 = vpop.f32.mrb[0].mxu0
  %v474 = vadd.f32 0.0, %v473
  %v475 = vpop.f32.mrb[0].mxu0
  %v476 = vadd.f32 0.0, %v475
  %v477 = vpop.f32.mrb[0].mxu0
  %v478 = vadd.f32 0.0, %v477
  %479 = vmatprep.mubr.bf16.mxu0 0
  %480 = vmatmul.mubr.bf16.gmra.mrb[0].mxu0 %v170
  %v481 = vpop.f32.mrb[0].mxu0
  %v482 = vadd.f32 0.0, %v481
  %v483 = vpop.f32.mrb[0].mxu0
  %v484 = vadd.f32 0.0, %v483
  %v485 = vpop.f32.mrb[0].mxu0
  %v486 = vadd.f32 0.0, %v485
  %v487 = vpop.f32.mrb[0].mxu0
  %v488 = vadd.f32 0.0, %v487
  %489 = vmatprep.mubr.bf16.mxu0 0
  %490 = vmatmul.mubr.bf16.gmra.mrb[0].mxu0 %v171
  %v491 = vpop.f32.mrb[0].mxu0
  %v492 = vadd.f32 0.0, %v491
  %v493 = vpop.f32.mrb[0].mxu0
  %v494 = vadd.f32 0.0, %v493
  %v495 = vpop.f32.mrb[0].mxu0
  %v496 = vadd.f32 0.0, %v495
  %v497 = vpop.f32.mrb[0].mxu0
  %v498 = vadd.f32 0.0, %v497
  %499 = vmatprep.mubr.bf16.mxu0 0
  %500 = vmatmul.mubr.bf16.gmra.mrb[0].mxu0 %v172
  %v501 = vpop.f32.mrb[0].mxu0
  %v502 = vadd.f32 0.0, %v501
  %v503 = vpop.f32.mrb[0].mxu0
  %v504 = vadd.f32 0.0, %v503
  %v505 = vpop.f32.mrb[0].mxu0
  %v506 = vadd.f32 0.0, %v505
  %v507 = vpop.f32.mrb[0].mxu0
  %v508 = vadd.f32 0.0, %v507
  %509 = vmatprep.mubr.bf16.mxu0 0
  %510 = vmatmul.mubr.bf16.gmra.mrb[0].mxu0 %v173
  %v511 = vpop.f32.mrb[0].mxu0
  %v512 = vadd.f32 0.0, %v511
  %v513 = vpop.f32.mrb[0].mxu0
  %v514 = vadd.f32 0.0, %v513
  %v515 = vpop.f32.mrb[0].mxu0
  %v516 = vadd.f32 0.0, %v515
  %v517 = vpop.f32.mrb[0].mxu0
  %v518 = vadd.f32 0.0, %v517
  %519 = vmatprep.mubr.bf16.mxu0 0
  %520 = vmatmul.mubr.bf16.gmra.mrb[0].mxu0 %v174
  %v521 = vpop.f32.mrb[0].mxu0
  %v522 = vadd.f32 0.0, %v521
  %v523 = vpop.f32.mrb[0].mxu0
  %v524 = vadd.f32 0.0, %v523
  %v525 = vpop.f32.mrb[0].mxu0
  %v526 = vadd.f32 0.0, %v525
  %v527 = vpop.f32.mrb[0].mxu0
  %v528 = vadd.f32 0.0, %v527
  %529 = vmatprep.mubr.bf16.mxu0 0
  %530 = vmatmul.mubr.bf16.gmra.mrb[0].mxu0 %v175
  %v531 = vpop.f32.mrb[0].mxu0
  %v532 = vadd.f32 0.0, %v531
  %v533 = vpop.f32.mrb[0].mxu0
  %v534 = vadd.f32 0.0, %v533
  %v535 = vpop.f32.mrb[0].mxu0
  %v536 = vadd.f32 0.0, %v535
  %v537 = vpop.f32.mrb[0].mxu0
  %v538 = vadd.f32 0.0, %v537
  %539 = vmatprep.mubr.bf16.mxu0 0
  %540 = vmatmul.mubr.bf16.gmra.mrb[0].mxu0 %v176
  %v541 = vpop.f32.mrb[0].mxu0
  %v542 = vadd.f32 0.0, %v541
  %v543 = vpop.f32.mrb[0].mxu0
  %v544 = vadd.f32 0.0, %v543
  %v545 = vpop.f32.mrb[0].mxu0
  %v546 = vadd.f32 0.0, %v545
  %v547 = vpop.f32.mrb[0].mxu0
  %v548 = vadd.f32 0.0, %v547
  %549 = vmatprep.mubr.bf16.mxu0 0
  %550 = vmatmul.mubr.bf16.gmra.mrb[0].mxu0 %v177
  %v551 = vpop.f32.mrb[0].mxu0
  %v552 = vadd.f32 0.0, %v551
  %v553 = vpop.f32.mrb[0].mxu0
  %v554 = vadd.f32 0.0, %v553
  %v555 = vpop.f32.mrb[0].mxu0
  %v556 = vadd.f32 0.0, %v555
  %v557 = vpop.f32.mrb[0].mxu0
  %v558 = vadd.f32 0.0, %v557
  %559 = vmatprep.mubr.bf16.mxu0 0
  %560 = vmatmul.mubr.bf16.gmra.mrb[0].mxu0 %v178
  %v561 = vpop.f32.mrb[0].mxu0
  %v562 = vadd.f32 0.0, %v561
  %v563 = vpop.f32.mrb[0].mxu0
  %v564 = vadd.f32 0.0, %v563
  %v565 = vpop.f32.mrb[0].mxu0
  %v566 = vadd.f32 0.0, %v565
  %v567 = vpop.f32.mrb[0].mxu0
  %v568 = vadd.f32 0.0, %v567
  %569 = vdwg.mxu0
  %570 = vmatprep.subr.bf16.mxu0 %v296
  %571 = vmatpush1.bf16.msra.mxu0 %v295
  %572 = vmatprep.subr.bf16.mxu0 %v300
  %573 = vmatpush1.bf16.msra.mxu0 %v299
  %574 = vmatprep.subr.bf16.mxu0 %v304
  %575 = vmatpush1.bf16.msra.mxu0 %v303
  %576 = vmatprep.subr.bf16.mxu0 %v308
  %577 = vmatpush1.bf16.msra.mxu0 %v307
  %578 = vmatprep.subr.bf16.mxu0 %v312
  %579 = vmatpush1.bf16.msra.mxu0 %v311
  %580 = vmatprep.subr.bf16.mxu0 %v316
  %581 = vmatpush1.bf16.msra.mxu0 %v315
  %582 = vmatprep.subr.bf16.mxu0 %v320
  %583 = vmatpush1.bf16.msra.mxu0 %v319
  %584 = vmatprep.subr.bf16.mxu0 %v324
  %585 = vmatpush1.bf16.msra.mxu0 %v323
  %586 = vmatprep.subr.bf16.mxu0 0
  %587 = vmatpush1.bf16.msra.mxu0 0
  %588 = vmatprep.subr.bf16.mxu0 0
  %589 = vmatpush1.bf16.msra.mxu0 0
  %590 = vmatprep.subr.bf16.mxu0 0
  %591 = vmatpush1.bf16.msra.mxu0 0
  %592 = vmatprep.subr.bf16.mxu0 0
  %593 = vmatpush1.bf16.msra.mxu0 0
  %594 = vmatprep.subr.bf16.mxu0 0
  %595 = vmatpush1.bf16.msra.mxu0 0
  %596 = vmatprep.subr.bf16.mxu0 0
  %597 = vmatpush1.bf16.msra.mxu0 0
  %598 = vmatprep.subr.bf16.mxu0 0
  %599 = vmatpush1.bf16.msra.mxu0 0
  %600 = vmatprep.subr.bf16.mxu0 0
  %601 = vmatpush1.bf16.msra.mxu0 0
  %602 = vmatprep.mubr.bf16.mxu0 0
  %603 = vmatmul.mubr.bf16.gmra.mrb[0].mxu0 %v161
  %v604 = vpop.f32.mrb[0].mxu0
  %v605 = vadd.f32 0.0, %v604
  %v606 = vpop.f32.mrb[0].mxu0
  %v607 = vadd.f32 0.0, %v606
  %v608 = vpop.f32.mrb[0].mxu0
  %v609 = vadd.f32 0.0, %v608
  %v610 = vpop.f32.mrb[0].mxu0
  %v611 = vadd.f32 0.0, %v610
  %612 = vmatprep.mubr.bf16.mxu0 0
  %613 = vmatmul.mubr.bf16.gmra.mrb[0].mxu0 %v162
  %v614 = vpop.f32.mrb[0].mxu0
  %v615 = vadd.f32 0.0, %v614
  %v616 = vpop.f32.mrb[0].mxu0
  %v617 = vadd.f32 0.0, %v616
  %v618 = vpop.f32.mrb[0].mxu0
  %v619 = vadd.f32 0.0, %v618
  %v620 = vpop.f32.mrb[0].mxu0
  %v621 = vadd.f32 0.0, %v620
  %622 = vmatprep.mubr.bf16.mxu0 0
  %623 = vmatmul.mubr.bf16.gmra.mrb[0].mxu0 %v163
  %v624 = vpop.f32.mrb[0].mxu0
  %v625 = vadd.f32 0.0, %v624
  %v626 = vpop.f32.mrb[0].mxu0
  %v627 = vadd.f32 0.0, %v626
  %v628 = vpop.f32.mrb[0].mxu0
  %v629 = vadd.f32 0.0, %v628
  %v630 = vpop.f32.mrb[0].mxu0
  %v631 = vadd.f32 0.0, %v630
  %632 = vmatprep.mubr.bf16.mxu0 0
  %633 = vmatmul.mubr.bf16.gmra.mrb[0].mxu0 %v164
  %v634 = vpop.f32.mrb[0].mxu0
  %v635 = vadd.f32 0.0, %v634
  %v636 = vpop.f32.mrb[0].mxu0
  %v637 = vadd.f32 0.0, %v636
  %v638 = vpop.f32.mrb[0].mxu0
  %v639 = vadd.f32 0.0, %v638
  %v640 = vpop.f32.mrb[0].mxu0
  %v641 = vadd.f32 0.0, %v640
  %642 = vmatprep.mubr.bf16.mxu0 0
  %643 = vmatmul.mubr.bf16.gmra.mrb[0].mxu0 %v165
  %v644 = vpop.f32.mrb[0].mxu0
  %v645 = vadd.f32 0.0, %v644
  %v646 = vpop.f32.mrb[0].mxu0
  %v647 = vadd.f32 0.0, %v646
  %v648 = vpop.f32.mrb[0].mxu0
  %v649 = vadd.f32 0.0, %v648
  %v650 = vpop.f32.mrb[0].mxu0
  %v651 = vadd.f32 0.0, %v650
  %652 = vmatprep.mubr.bf16.mxu0 0
  %653 = vmatmul.mubr.bf16.gmra.mrb[0].mxu0 %v166
  %v654 = vpop.f32.mrb[0].mxu0
  %v655 = vadd.f32 0.0, %v654
  %v656 = vpop.f32.mrb[0].mxu0
  %v657 = vadd.f32 0.0, %v656
  %v658 = vpop.f32.mrb[0].mxu0
  %v659 = vadd.f32 0.0, %v658
  %v660 = vpop.f32.mrb[0].mxu0
  %v661 = vadd.f32 0.0, %v660
  %662 = vmatprep.mubr.bf16.mxu0 0
  %663 = vmatmul.mubr.bf16.gmra.mrb[0].mxu0 %v167
  %v664 = vpop.f32.mrb[0].mxu0
  %v665 = vadd.f32 0.0, %v664
  %v666 = vpop.f32.mrb[0].mxu0
  %v667 = vadd.f32 0.0, %v666
  %v668 = vpop.f32.mrb[0].mxu0
  %v669 = vadd.f32 0.0, %v668
  %v670 = vpop.f32.mrb[0].mxu0
  %v671 = vadd.f32 0.0, %v670
  %672 = vmatprep.mubr.bf16.mxu0 0
  %673 = vmatmul.mubr.bf16.gmra.mrb[0].mxu0 %v168
  %v674 = vpop.f32.mrb[0].mxu0
  %v675 = vadd.f32 0.0, %v674
  %v676 = vpop.f32.mrb[0].mxu0
  %v677 = vadd.f32 0.0, %v676
  %v678 = vpop.f32.mrb[0].mxu0
  %v679 = vadd.f32 0.0, %v678
  %v680 = vpop.f32.mrb[0].mxu0
  %v681 = vadd.f32 0.0, %v680
  %682 = vmatprep.mubr.bf16.mxu0 0
  %683 = vmatmul.mubr.bf16.gmra.mrb[0].mxu0 %v169
  %v684 = vpop.f32.mrb[0].mxu0
  %v685 = vadd.f32 0.0, %v684
  %v686 = vpop.f32.mrb[0].mxu0
  %v687 = vadd.f32 0.0, %v686
  %v688 = vpop.f32.mrb[0].mxu0
  %v689 = vadd.f32 0.0, %v688
  %v690 = vpop.f32.mrb[0].mxu0
  %v691 = vadd.f32 0.0, %v690
  %692 = vmatprep.mubr.bf16.mxu0 0
  %693 = vmatmul.mubr.bf16.gmra.mrb[0].mxu0 %v170
  %v694 = vpop.f32.mrb[0].mxu0
  %v695 = vadd.f32 0.0, %v694
  %v696 = vpop.f32.mrb[0].mxu0
  %v697 = vadd.f32 0.0, %v696
  %v698 = vpop.f32.mrb[0].mxu0
  %v699 = vadd.f32 0.0, %v698
  %v700 = vpop.f32.mrb[0].mxu0
  %v701 = vadd.f32 0.0, %v700
  %702 = vmatprep.mubr.bf16.mxu0 0
  %703 = vmatmul.mubr.bf16.gmra.mrb[0].mxu0 %v171
  %v704 = vpop.f32.mrb[0].mxu0
  %v705 = vadd.f32 0.0, %v704
  %v706 = vpop.f32.mrb[0].mxu0
  %v707 = vadd.f32 0.0, %v706
  %v708 = vpop.f32.mrb[0].mxu0
  %v709 = vadd.f32 0.0, %v708
  %v710 = vpop.f32.mrb[0].mxu0
  %v711 = vadd.f32 0.0, %v710
  %712 = vmatprep.mubr.bf16.mxu0 0
  %713 = vmatmul.mubr.bf16.gmra.mrb[0].mxu0 %v172
  %v714 = vpop.f32.mrb[0].mxu0
  %v715 = vadd.f32 0.0, %v714
  %v716 = vpop.f32.mrb[0].mxu0
  %v717 = vadd.f32 0.0, %v716
  %v718 = vpop.f32.mrb[0].mxu0
  %v719 = vadd.f32 0.0, %v718
  %v720 = vpop.f32.mrb[0].mxu0
  %v721 = vadd.f32 0.0, %v720
  %722 = vmatprep.mubr.bf16.mxu0 0
  %723 = vmatmul.mubr.bf16.gmra.mrb[0].mxu0 %v173
  %v724 = vpop.f32.mrb[0].mxu0
  %v725 = vadd.f32 0.0, %v724
  %v726 = vpop.f32.mrb[0].mxu0
  %v727 = vadd.f32 0.0, %v726
  %v728 = vpop.f32.mrb[0].mxu0
  %v729 = vadd.f32 0.0, %v728
  %v730 = vpop.f32.mrb[0].mxu0
  %v731 = vadd.f32 0.0, %v730
  %732 = vmatprep.mubr.bf16.mxu0 0
  %733 = vmatmul.mubr.bf16.gmra.mrb[0].mxu0 %v174
  %v734 = vpop.f32.mrb[0].mxu0
  %v735 = vadd.f32 0.0, %v734
  %v736 = vpop.f32.mrb[0].mxu0
  %v737 = vadd.f32 0.0, %v736
  %v738 = vpop.f32.mrb[0].mxu0
  %v739 = vadd.f32 0.0, %v738
  %v740 = vpop.f32.mrb[0].mxu0
  %v741 = vadd.f32 0.0, %v740
  %742 = vmatprep.mubr.bf16.mxu0 0
  %743 = vmatmul.mubr.bf16.gmra.mrb[0].mxu0 %v175
  %v744 = vpop.f32.mrb[0].mxu0
  %v745 = vadd.f32 0.0, %v744
  %v746 = vpop.f32.mrb[0].mxu0
  %v747 = vadd.f32 0.0, %v746
  %v748 = vpop.f32.mrb[0].mxu0
  %v749 = vadd.f32 0.0, %v748
  %v750 = vpop.f32.mrb[0].mxu0
  %v751 = vadd.f32 0.0, %v750
  %752 = vmatprep.mubr.bf16.mxu0 0
  %753 = vmatmul.mubr.bf16.gmra.mrb[0].mxu0 %v176
  %v754 = vpop.f32.mrb[0].mxu0
  %v755 = vadd.f32 0.0, %v754
  %v756 = vpop.f32.mrb[0].mxu0
  %v757 = vadd.f32 0.0, %v756
  %v758 = vpop.f32.mrb[0].mxu0
  %v759 = vadd.f32 0.0, %v758
  %v760 = vpop.f32.mrb[0].mxu0
  %v761 = vadd.f32 0.0, %v760
  %762 = vmatprep.mubr.bf16.mxu0 0
  %763 = vmatmul.mubr.bf16.gmra.mrb[0].mxu0 %v177
  %v764 = vpop.f32.mrb[0].mxu0
  %v765 = vadd.f32 0.0, %v764
  %v766 = vpop.f32.mrb[0].mxu0
  %v767 = vadd.f32 0.0, %v766
  %v768 = vpop.f32.mrb[0].mxu0
  %v769 = vadd.f32 0.0, %v768
  %v770 = vpop.f32.mrb[0].mxu0
  %v771 = vadd.f32 0.0, %v770
  %772 = vmatprep.mubr.bf16.mxu0 0
  %773 = vmatmul.mubr.bf16.gmra.mrb[0].mxu0 %v178
  %v774 = vpop.f32.mrb[0].mxu0
  %v775 = vadd.f32 0.0, %v774
  %v776 = vpop.f32.mrb[0].mxu0
  %v777 = vadd.f32 0.0, %v776
  %v778 = vpop.f32.mrb[0].mxu0
  %v779 = vadd.f32 0.0, %v778
  %v780 = vpop.f32.mrb[0].mxu0
  %v781 = vadd.f32 0.0, %v780
  %782 = vdwg.mxu0
  %v783 = vmax.f32 %v392, 0.0
  %v784 = vmax.f32 %v394, 0.0
  %v785 = vmax.f32 %v605, 0.0
  %v786 = vmax.f32 %v607, 0.0
  %v787 = vmax.f32 %v396, 0.0
  %v788 = vmax.f32 %v398, 0.0
  %v789 = vmax.f32 %v609, 0.0
  %v790 = vmax.f32 %v611, 0.0
  %v791 = vmax.f32 %v402, 0.0
  %v792 = vmax.f32 %v404, 0.0
  %v793 = vmax.f32 %v615, 0.0
  %v794 = vmax.f32 %v617, 0.0
  %v795 = vmax.f32 %v406, 0.0
  %v796 = vmax.f32 %v408, 0.0
  %v797 = vmax.f32 %v619, 0.0
  %v798 = vmax.f32 %v621, 0.0
  %v799 = vmax.f32 %v412, 0.0
  %v800 = vmax.f32 %v414, 0.0
  %v801 = vmax.f32 %v625, 0.0
  %v802 = vmax.f32 %v627, 0.0
  %v803 = vmax.f32 %v416, 0.0
  %v804 = vmax.f32 %v418, 0.0
  %v805 = vmax.f32 %v629, 0.0
  %v806 = vmax.f32 %v631, 0.0
  %v807 = vmax.f32 %v422, 0.0
  %v808 = vmax.f32 %v424, 0.0
  %v809 = vmax.f32 %v635, 0.0
  %v810 = vmax.f32 %v637, 0.0
  %v811 = vmax.f32 %v426, 0.0
  %v812 = vmax.f32 %v428, 0.0
  %v813 = vmax.f32 %v639, 0.0
  %v814 = vmax.f32 %v641, 0.0
  %v815 = vmax.f32 %v432, 0.0
  %v816 = vmax.f32 %v434, 0.0
  %v817 = vmax.f32 %v645, 0.0
  %v818 = vmax.f32 %v647, 0.0
  %v819 = vmax.f32 %v436, 0.0
  %v820 = vmax.f32 %v438, 0.0
  %v821 = vmax.f32 %v649, 0.0
  %v822 = vmax.f32 %v651, 0.0
  %v823 = vmax.f32 %v442, 0.0
  %v824 = vmax.f32 %v444, 0.0
  %v825 = vmax.f32 %v655, 0.0
  %v826 = vmax.f32 %v657, 0.0
  %v827 = vmax.f32 %v446, 0.0
  %v828 = vmax.f32 %v448, 0.0
  %v829 = vmax.f32 %v659, 0.0
  %v830 = vmax.f32 %v661, 0.0
  %v831 = vmax.f32 %v452, 0.0
  %v832 = vmax.f32 %v454, 0.0
  %v833 = vmax.f32 %v665, 0.0
  %v834 = vmax.f32 %v667, 0.0
  %v835 = vmax.f32 %v456, 0.0
  %v836 = vmax.f32 %v458, 0.0
  %v837 = vmax.f32 %v669, 0.0
  %v838 = vmax.f32 %v671, 0.0
  %v839 = vmax.f32 %v462, 0.0
  %v840 = vmax.f32 %v464, 0.0
  %v841 = vmax.f32 %v675, 0.0
  %v842 = vmax.f32 %v677, 0.0
  %v843 = vmax.f32 %v466, 0.0
  %v844 = vmax.f32 %v468, 0.0
  %v845 = vmax.f32 %v679, 0.0
  %v846 = vmax.f32 %v681, 0.0
  %v847 = vmax.f32 %v472, 0.0
  %v848 = vmax.f32 %v474, 0.0
  %v849 = vmax.f32 %v685, 0.0
  %v850 = vmax.f32 %v687, 0.0
  %v851 = vmax.f32 %v476, 0.0
  %v852 = vmax.f32 %v478, 0.0
  %v853 = vmax.f32 %v689, 0.0
  %v854 = vmax.f32 %v691, 0.0
  %v855 = vmax.f32 %v482, 0.0
  %v856 = vmax.f32 %v484, 0.0
  %v857 = vmax.f32 %v695, 0.0
  %v858 = vmax.f32 %v697, 0.0
  %v859 = vmax.f32 %v486, 0.0
  %v860 = vmax.f32 %v488, 0.0
  %v861 = vmax.f32 %v699, 0.0
  %v862 = vmax.f32 %v701, 0.0
  %v863 = vmax.f32 %v492, 0.0
  %v864 = vmax.f32 %v494, 0.0
  %v865 = vmax.f32 %v705, 0.0
  %v866 = vmax.f32 %v707, 0.0
  %v867 = vmax.f32 %v496, 0.0
  %v868 = vmax.f32 %v498, 0.0
  %v869 = vmax.f32 %v709, 0.0
  %v870 = vmax.f32 %v711, 0.0
  %v871 = vmax.f32 %v502, 0.0
  %v872 = vmax.f32 %v504, 0.0
  %v873 = vmax.f32 %v715, 0.0
  %v874 = vmax.f32 %v717, 0.0
  %v875 = vmax.f32 %v506, 0.0
  %v876 = vmax.f32 %v508, 0.0
  %v877 = vmax.f32 %v719, 0.0
  %v878 = vmax.f32 %v721, 0.0
  %v879 = vmax.f32 %v512, 0.0
  %v880 = vmax.f32 %v514, 0.0
  %v881 = vmax.f32 %v725, 0.0
  %v882 = vmax.f32 %v727, 0.0
  %v883 = vmax.f32 %v516, 0.0
  %v884 = vmax.f32 %v518, 0.0
  %v885 = vmax.f32 %v729, 0.0
  %v886 = vmax.f32 %v731, 0.0
  %v887 = vmax.f32 %v522, 0.0
  %v888 = vmax.f32 %v524, 0.0
  %v889 = vmax.f32 %v735, 0.0
  %v890 = vmax.f32 %v737, 0.0
  %v891 = vmax.f32 %v526, 0.0
  %v892 = vmax.f32 %v528, 0.0
  %v893 = vmax.f32 %v739, 0.0
  %v894 = vmax.f32 %v741, 0.0
  %v895 = vmax.f32 %v532, 0.0
  %v896 = vmax.f32 %v534, 0.0
  %v897 = vmax.f32 %v745, 0.0
  %v898 = vmax.f32 %v747, 0.0
  %v899 = vmax.f32 %v536, 0.0
  %v900 = vmax.f32 %v538, 0.0
  %v901 = vmax.f32 %v749, 0.0
  %v902 = vmax.f32 %v751, 0.0
  %v903 = vmax.f32 %v542, 0.0
  %v904 = vmax.f32 %v544, 0.0
  %v905 = vmax.f32 %v755, 0.0
  %v906 = vmax.f32 %v757, 0.0
  %v907 = vmax.f32 %v546, 0.0
  %v908 = vmax.f32 %v548, 0.0
  %v909 = vmax.f32 %v759, 0.0
  %v910 = vmax.f32 %v761, 0.0
  %v911 = vmax.f32 %v552, 0.0
  %v912 = vmax.f32 %v554, 0.0
  %v913 = vmax.f32 %v765, 0.0
  %v914 = vmax.f32 %v767, 0.0
  %v915 = vmax.f32 %v556, 0.0
  %v916 = vmax.f32 %v558, 0.0
  %v917 = vmax.f32 %v769, 0.0
  %v918 = vmax.f32 %v771, 0.0
  %v919 = vmax.f32 %v562, 0.0
  %v920 = vmax.f32 %v564, 0.0
  %v921 = vmax.f32 %v775, 0.0
  %v922 = vmax.f32 %v777, 0.0
  %v923 = vmax.f32 %v566, 0.0
  %v924 = vmax.f32 %v568, 0.0
  %v925 = vmax.f32 %v779, 0.0
  %v926 = vmax.f32 %v781, 0.0
  %v927 = vpack.c.bf16 %v787, %v783
  %v928 = vpack.c.bf16 %v788, %v784
  %v929 = vpack.c.bf16 %v789, %v785
  %v930 = vpack.c.bf16 %v790, %v786
  %v931 = vpack.c.bf16 %v795, %v791
  %v932 = vpack.c.bf16 %v796, %v792
  %v933 = vpack.c.bf16 %v797, %v793
  %v934 = vpack.c.bf16 %v798, %v794
  %v935 = vpack.c.bf16 %v803, %v799
  %v936 = vpack.c.bf16 %v804, %v800
  %v937 = vpack.c.bf16 %v805, %v801
  %v938 = vpack.c.bf16 %v806, %v802
  %v939 = vpack.c.bf16 %v811, %v807
  %v940 = vpack.c.bf16 %v812, %v808
  %v941 = vpack.c.bf16 %v813, %v809
  %v942 = vpack.c.bf16 %v814, %v810
  %v943 = vpack.c.bf16 %v819, %v815
  %v944 = vpack.c.bf16 %v820, %v816
  %v945 = vpack.c.bf16 %v821, %v817
  %v946 = vpack.c.bf16 %v822, %v818
  %v947 = vpack.c.bf16 %v827, %v823
  %v948 = vpack.c.bf16 %v828, %v824
  %v949 = vpack.c.bf16 %v829, %v825
  %v950 = vpack.c.bf16 %v830, %v826
  %v951 = vpack.c.bf16 %v835, %v831
  %v952 = vpack.c.bf16 %v836, %v832
  %v953 = vpack.c.bf16 %v837, %v833
  %v954 = vpack.c.bf16 %v838, %v834
  %v955 = vpack.c.bf16 %v843, %v839
  %v956 = vpack.c.bf16 %v844, %v840
  %v957 = vpack.c.bf16 %v845, %v841
  %v958 = vpack.c.bf16 %v846, %v842
  %v959 = vpack.c.bf16 %v851, %v847
  %v960 = vpack.c.bf16 %v852, %v848
  %v961 = vpack.c.bf16 %v853, %v849
  %v962 = vpack.c.bf16 %v854, %v850
  %v963 = vpack.c.bf16 %v859, %v855
  %v964 = vpack.c.bf16 %v860, %v856
  %v965 = vpack.c.bf16 %v861, %v857
  %v966 = vpack.c.bf16 %v862, %v858
  %v967 = vpack.c.bf16 %v867, %v863
  %v968 = vpack.c.bf16 %v868, %v864
  %v969 = vpack.c.bf16 %v869, %v865
  %v970 = vpack.c.bf16 %v870, %v866
  %v971 = vpack.c.bf16 %v875, %v871
  %v972 = vpack.c.bf16 %v876, %v872
  %v973 = vpack.c.bf16 %v877, %v873
  %v974 = vpack.c.bf16 %v878, %v874
  %v975 = vpack.c.bf16 %v883, %v879
  %v976 = vpack.c.bf16 %v884, %v880
  %v977 = vpack.c.bf16 %v885, %v881
  %v978 = vpack.c.bf16 %v886, %v882
  %v979 = vpack.c.bf16 %v891, %v887
  %v980 = vpack.c.bf16 %v892, %v888
  %v981 = vpack.c.bf16 %v893, %v889
  %v982 = vpack.c.bf16 %v894, %v890
  %v983 = vpack.c.bf16 %v899, %v895
  %v984 = vpack.c.bf16 %v900, %v896
  %v985 = vpack.c.bf16 %v901, %v897
  %v986 = vpack.c.bf16 %v902, %v898
  %v987 = vpack.c.bf16 %v907, %v903
  %v988 = vpack.c.bf16 %v908, %v904
  %v989 = vpack.c.bf16 %v909, %v905
  %v990 = vpack.c.bf16 %v910, %v906
  %v991 = vpack.c.bf16 %v915, %v911
  %v992 = vpack.c.bf16 %v916, %v912
  %v993 = vpack.c.bf16 %v917, %v913
  %v994 = vpack.c.bf16 %v918, %v914
  %v995 = vpack.c.bf16 %v923, %v919
  %v996 = vpack.c.bf16 %v924, %v920
  %v997 = vpack.c.bf16 %v925, %v921
  %v998 = vpack.c.bf16 %v926, %v922
  %v999 = vld [vmem:[%s2] sm:$0xff]
  %v1000 = vld [vmem:[%s2 + $0x8] sm:$0xf]
  %v1001 = vld [vmem:[%s2 + $0xc] sm:$0xff]
  %v1002 = vld [vmem:[%s2 + $0x14] sm:$0xf]
  %v1003 = vld [vmem:[%s2 + $0x18] sm:$0xff]
  %v1004 = vld [vmem:[%s2 + $0x20] sm:$0xf]
  %v1005 = vld [vmem:[%s2 + $0x24] sm:$0xff]
  %v1006 = vld [vmem:[%s2 + $0x2c] sm:$0xf]
  %v1015 = vunpack.c.l.b16 %v999
  %v1016 = vunpack.c.h.b16 %v999
  %v1017 = vunpack.c.l.b16 %v1000
  %v1018 = vunpack.c.l.b16 %v1001
  %v1019 = vunpack.c.h.b16 %v1001
  %v1020 = vunpack.c.l.b16 %v1002
  %v1021 = vunpack.c.l.b16 %v1003
  %v1022 = vunpack.c.h.b16 %v1003
  %v1023 = vunpack.c.l.b16 %v1004
  %v1024 = vunpack.c.l.b16 %v1005
  %v1025 = vunpack.c.h.b16 %v1005
  %v1026 = vunpack.c.l.b16 %v1006
  %v1027 = vpack.c.b16 %v1018, %v1015
  %v1028 = vpack.c.b16 %v1019, %v1016
  %v1029 = vpack.c.b16 %v1020, %v1017
  %v1030 = vpack.c.b16 %v1024, %v1021
  %v1031 = vpack.c.b16 %v1025, %v1022
  %v1032 = vpack.c.b16 %v1026, %v1023
  %vm1037 = vcmask 261120
  %v1039 = vsel %vm1037, %v1029, 0
  %v1042 = vsel %vm1037, %v1032, 0
  %1044 = vmatprep.subr.bf16.mxu0 %v928
  %1045 = vmatpush1.bf16.msra.mxu0 %v927
  %1046 = vmatprep.subr.bf16.mxu0 %v932
  %1047 = vmatpush1.bf16.msra.mxu0 %v931
  %1048 = vmatprep.subr.bf16.mxu0 %v936
  %1049 = vmatpush1.bf16.msra.mxu0 %v935
  %1050 = vmatprep.subr.bf16.mxu0 %v940
  %1051 = vmatpush1.bf16.msra.mxu0 %v939
  %1052 = vmatprep.subr.bf16.mxu0 %v944
  %1053 = vmatpush1.bf16.msra.mxu0 %v943
  %1054 = vmatprep.subr.bf16.mxu0 %v948
  %1055 = vmatpush1.bf16.msra.mxu0 %v947
  %1056 = vmatprep.subr.bf16.mxu0 %v952
  %1057 = vmatpush1.bf16.msra.mxu0 %v951
  %1058 = vmatprep.subr.bf16.mxu0 %v956
  %1059 = vmatpush1.bf16.msra.mxu0 %v955
  %1060 = vmatprep.subr.bf16.mxu0 %v960
  %1061 = vmatpush1.bf16.msra.mxu0 %v959
  %1062 = vmatprep.subr.bf16.mxu0 %v964
  %1063 = vmatpush1.bf16.msra.mxu0 %v963
  %1064 = vmatprep.subr.bf16.mxu0 %v968
  %1065 = vmatpush1.bf16.msra.mxu0 %v967
  %1066 = vmatprep.subr.bf16.mxu0 %v972
  %1067 = vmatpush1.bf16.msra.mxu0 %v971
  %1068 = vmatprep.subr.bf16.mxu0 %v976
  %1069 = vmatpush1.bf16.msra.mxu0 %v975
  %1070 = vmatprep.subr.bf16.mxu0 %v980
  %1071 = vmatpush1.bf16.msra.mxu0 %v979
  %1072 = vmatprep.subr.bf16.mxu0 %v984
  %1073 = vmatpush1.bf16.msra.mxu0 %v983
  %1074 = vmatprep.subr.bf16.mxu0 %v988
  %1075 = vmatpush1.bf16.msra.mxu0 %v987
  %1076 = vmatprep.mubr.bf16.mxu0 %v1028
  %1077 = vmatmul.mubr.bf16.gmra.mrb[0].mxu0 %v1027
  %v1078 = vpop.f32.mrb[0].mxu0
  %v1079 = vadd.f32 0.0, %v1078
  %v1080 = vpop.f32.mrb[0].mxu0
  %v1081 = vadd.f32 0.0, %v1080
  %v1082 = vpop.f32.mrb[0].mxu0
  %v1083 = vadd.f32 0.0, %v1082
  %v1084 = vpop.f32.mrb[0].mxu0
  %v1085 = vadd.f32 0.0, %v1084
  %1086 = vmatprep.mubr.bf16.mxu0 %v1031
  %1087 = vmatmul.mubr.bf16.gmra.mrb[0].mxu0 %v1030
  %v1088 = vpop.f32.mrb[0].mxu0
  %v1089 = vadd.f32 0.0, %v1088
  %v1090 = vpop.f32.mrb[0].mxu0
  %v1091 = vadd.f32 0.0, %v1090
  %v1092 = vpop.f32.mrb[0].mxu0
  %v1093 = vadd.f32 0.0, %v1092
  %v1094 = vpop.f32.mrb[0].mxu0
  %v1095 = vadd.f32 0.0, %v1094
  %1096 = vdwg.mxu0
  %1097 = vmatprep.subr.bf16.mxu0 %v992
  %1098 = vmatpush1.bf16.msra.mxu0 %v991
  %1099 = vmatprep.subr.bf16.mxu0 %v996
  %1100 = vmatpush1.bf16.msra.mxu0 %v995
  %1101 = vmatprep.subr.bf16.mxu0 0
  %1102 = vmatpush1.bf16.msra.mxu0 0
  %1103 = vmatprep.subr.bf16.mxu0 0
  %1104 = vmatpush1.bf16.msra.mxu0 0
  %1105 = vmatprep.subr.bf16.mxu0 0
  %1106 = vmatpush1.bf16.msra.mxu0 0
  %1107 = vmatprep.subr.bf16.mxu0 0
  %1108 = vmatpush1.bf16.msra.mxu0 0
  %1109 = vmatprep.subr.bf16.mxu0 0
  %1110 = vmatpush1.bf16.msra.mxu0 0
  %1111 = vmatprep.subr.bf16.mxu0 0
  %1112 = vmatpush1.bf16.msra.mxu0 0
  %1113 = vmatprep.subr.bf16.mxu0 0
  %1114 = vmatpush1.bf16.msra.mxu0 0
  %1115 = vmatprep.subr.bf16.mxu0 0
  %1116 = vmatpush1.bf16.msra.mxu0 0
  %1117 = vmatprep.subr.bf16.mxu0 0
  %1118 = vmatpush1.bf16.msra.mxu0 0
  %1119 = vmatprep.subr.bf16.mxu0 0
  %1120 = vmatpush1.bf16.msra.mxu0 0
  %1121 = vmatprep.subr.bf16.mxu0 0
  %1122 = vmatpush1.bf16.msra.mxu0 0
  %1123 = vmatprep.subr.bf16.mxu0 0
  %1124 = vmatpush1.bf16.msra.mxu0 0
  %1125 = vmatprep.subr.bf16.mxu0 0
  %1126 = vmatpush1.bf16.msra.mxu0 0
  %1127 = vmatprep.subr.bf16.mxu0 0
  %1128 = vmatpush1.bf16.msra.mxu0 0
  %1129 = vmatprep.mubr.bf16.mxu0 0
  %1130 = vmatmul.mubr.bf16.gmra.mrb[0].mxu0 %v1039
  %v1131 = vpop.f32.mrb[0].mxu0
  %v1132 = vadd.f32 %v1079, %v1131
  %v1133 = vpop.f32.mrb[0].mxu0
  %v1134 = vadd.f32 %v1081, %v1133
  %v1135 = vpop.f32.mrb[0].mxu0
  %v1136 = vadd.f32 %v1083, %v1135
  %v1137 = vpop.f32.mrb[0].mxu0
  %v1138 = vadd.f32 %v1085, %v1137
  %1139 = vmatprep.mubr.bf16.mxu0 0
  %1140 = vmatmul.mubr.bf16.gmra.mrb[0].mxu0 %v1042
  %v1141 = vpop.f32.mrb[0].mxu0
  %v1142 = vadd.f32 %v1089, %v1141
  %v1143 = vpop.f32.mrb[0].mxu0
  %v1144 = vadd.f32 %v1091, %v1143
  %v1145 = vpop.f32.mrb[0].mxu0
  %v1146 = vadd.f32 %v1093, %v1145
  %v1147 = vpop.f32.mrb[0].mxu0
  %v1148 = vadd.f32 %v1095, %v1147
  %1149 = vdwg.mxu0
  %1150 = vmatprep.subr.bf16.mxu0 %v930
  %1151 = vmatpush1.bf16.msra.mxu0 %v929
  %1152 = vmatprep.subr.bf16.mxu0 %v934
  %1153 = vmatpush1.bf16.msra.mxu0 %v933
  %1154 = vmatprep.subr.bf16.mxu0 %v938
  %1155 = vmatpush1.bf16.msra.mxu0 %v937
  %1156 = vmatprep.subr.bf16.mxu0 %v942
  %1157 = vmatpush1.bf16.msra.mxu0 %v941
  %1158 = vmatprep.subr.bf16.mxu0 %v946
  %1159 = vmatpush1.bf16.msra.mxu0 %v945
  %1160 = vmatprep.subr.bf16.mxu0 %v950
  %1161 = vmatpush1.bf16.msra.mxu0 %v949
  %1162 = vmatprep.subr.bf16.mxu0 %v954
  %1163 = vmatpush1.bf16.msra.mxu0 %v953
  %1164 = vmatprep.subr.bf16.mxu0 %v958
  %1165 = vmatpush1.bf16.msra.mxu0 %v957
  %1166 = vmatprep.subr.bf16.mxu0 %v962
  %1167 = vmatpush1.bf16.msra.mxu0 %v961
  %1168 = vmatprep.subr.bf16.mxu0 %v966
  %1169 = vmatpush1.bf16.msra.mxu0 %v965
  %1170 = vmatprep.subr.bf16.mxu0 %v970
  %1171 = vmatpush1.bf16.msra.mxu0 %v969
  %1172 = vmatprep.subr.bf16.mxu0 %v974
  %1173 = vmatpush1.bf16.msra.mxu0 %v973
  %1174 = vmatprep.subr.bf16.mxu0 %v978
  %1175 = vmatpush1.bf16.msra.mxu0 %v977
  %1176 = vmatprep.subr.bf16.mxu0 %v982
  %1177 = vmatpush1.bf16.msra.mxu0 %v981
  %1178 = vmatprep.subr.bf16.mxu0 %v986
  %1179 = vmatpush1.bf16.msra.mxu0 %v985
  %1180 = vmatprep.subr.bf16.mxu0 %v990
  %1181 = vmatpush1.bf16.msra.mxu0 %v989
  %1182 = vmatprep.mubr.bf16.mxu0 %v1028
  %1183 = vmatmul.mubr.bf16.gmra.mrb[0].mxu0 %v1027
  %v1184 = vpop.f32.mrb[0].mxu0
  %v1185 = vadd.f32 0.0, %v1184
  %v1186 = vpop.f32.mrb[0].mxu0
  %v1187 = vadd.f32 0.0, %v1186
  %v1188 = vpop.f32.mrb[0].mxu0
  %v1189 = vadd.f32 0.0, %v1188
  %v1190 = vpop.f32.mrb[0].mxu0
  %v1191 = vadd.f32 0.0, %v1190
  %1192 = vmatprep.mubr.bf16.mxu0 %v1031
  %1193 = vmatmul.mubr.bf16.gmra.mrb[0].mxu0 %v1030
  %v1194 = vpop.f32.mrb[0].mxu0
  %v1195 = vadd.f32 0.0, %v1194
  %v1196 = vpop.f32.mrb[0].mxu0
  %v1197 = vadd.f32 0.0, %v1196
  %v1198 = vpop.f32.mrb[0].mxu0
  %v1199 = vadd.f32 0.0, %v1198
  %v1200 = vpop.f32.mrb[0].mxu0
  %v1201 = vadd.f32 0.0, %v1200
  %1202 = vdwg.mxu0
  %1203 = vmatprep.subr.bf16.mxu0 %v994
  %1204 = vmatpush1.bf16.msra.mxu0 %v993
  %1205 = vmatprep.subr.bf16.mxu0 %v998
  %1206 = vmatpush1.bf16.msra.mxu0 %v997
  %1207 = vmatprep.subr.bf16.mxu0 0
  %1208 = vmatpush1.bf16.msra.mxu0 0
  %1209 = vmatprep.subr.bf16.mxu0 0
  %1210 = vmatpush1.bf16.msra.mxu0 0
  %1211 = vmatprep.subr.bf16.mxu0 0
  %1212 = vmatpush1.bf16.msra.mxu0 0
  %1213 = vmatprep.subr.bf16.mxu0 0
  %1214 = vmatpush1.bf16.msra.mxu0 0
  %1215 = vmatprep.subr.bf16.mxu0 0
  %1216 = vmatpush1.bf16.msra.mxu0 0
  %1217 = vmatprep.subr.bf16.mxu0 0
  %1218 = vmatpush1.bf16.msra.mxu0 0
  %1219 = vmatprep.subr.bf16.mxu0 0
  %1220 = vmatpush1.bf16.msra.mxu0 0
  %1221 = vmatprep.subr.bf16.mxu0 0
  %1222 = vmatpush1.bf16.msra.mxu0 0
  %1223 = vmatprep.subr.bf16.mxu0 0
  %1224 = vmatpush1.bf16.msra.mxu0 0
  %1225 = vmatprep.subr.bf16.mxu0 0
  %1226 = vmatpush1.bf16.msra.mxu0 0
  %1227 = vmatprep.subr.bf16.mxu0 0
  %1228 = vmatpush1.bf16.msra.mxu0 0
  %1229 = vmatprep.subr.bf16.mxu0 0
  %1230 = vmatpush1.bf16.msra.mxu0 0
  %1231 = vmatprep.subr.bf16.mxu0 0
  %1232 = vmatpush1.bf16.msra.mxu0 0
  %1233 = vmatprep.subr.bf16.mxu0 0
  %1234 = vmatpush1.bf16.msra.mxu0 0
  %1235 = vmatprep.mubr.bf16.mxu0 0
  %1236 = vmatmul.mubr.bf16.gmra.mrb[0].mxu0 %v1039
  %v1237 = vpop.f32.mrb[0].mxu0
  %v1238 = vadd.f32 %v1185, %v1237
  %v1239 = vpop.f32.mrb[0].mxu0
  %v1240 = vadd.f32 %v1187, %v1239
  %v1241 = vpop.f32.mrb[0].mxu0
  %v1242 = vadd.f32 %v1189, %v1241
  %v1243 = vpop.f32.mrb[0].mxu0
  %v1244 = vadd.f32 %v1191, %v1243
  %1245 = vmatprep.mubr.bf16.mxu0 0
  %1246 = vmatmul.mubr.bf16.gmra.mrb[0].mxu0 %v1042
  %v1247 = vpop.f32.mrb[0].mxu0
  %v1248 = vadd.f32 %v1195, %v1247
  %v1249 = vpop.f32.mrb[0].mxu0
  %v1250 = vadd.f32 %v1197, %v1249
  %v1251 = vpop.f32.mrb[0].mxu0
  %v1252 = vadd.f32 %v1199, %v1251
  %v1253 = vpop.f32.mrb[0].mxu0
  %v1254 = vadd.f32 %v1201, %v1253
  %1255 = vdwg.mxu0
  %v1256 = vadd.f32 %v1132, %v1134
  %v1257 = vadd.f32 %v1256, %v1238
  %v1258 = vadd.f32 %v1257, %v1240
  %1259 = vadd.xlane.f32.xlu0 %v1258
  %v1260 = vpop.xlane.xlu0 %1259
  %v1261 = vadd.f32 %v1136, %v1138
  %v1262 = vadd.f32 %v1261, %v1242
  %v1263 = vadd.f32 %v1262, %v1244
  %1264 = vadd.xlane.f32.xlu0 %v1263
  %v1265 = vpop.xlane.xlu0 %1264
  %v1266 = vadd.f32 %v1142, %v1144
  %v1267 = vadd.f32 %v1266, %v1248
  %v1268 = vadd.f32 %v1267, %v1250
  %1269 = vadd.xlane.f32.xlu0 %v1268
  %v1270 = vpop.xlane.xlu0 %1269
  %v1271 = vadd.f32 %v1146, %v1148
  %v1272 = vadd.f32 %v1271, %v1252
  %v1273 = vadd.f32 %v1272, %v1254
  %1274 = vadd.xlane.f32.xlu0 %v1273
  %v1275 = vpop.xlane.xlu0 %1274
  %v1276 = vmul.f32 %v1260, 0.001953125
  %v1277 = vmul.f32 %v1265, 0.001953125
  %v1278 = vmul.f32 %v1270, 0.001953125
  %v1279 = vmul.f32 %v1275, 0.001953125
  %v1280 = vsub.f32 %v1132, %v1276
  %v1281 = vsub.f32 %v1134, %v1276
  %v1282 = vsub.f32 %v1238, %v1276
  %v1283 = vsub.f32 %v1240, %v1276
  %v1284 = vsub.f32 %v1136, %v1277
  %v1285 = vsub.f32 %v1138, %v1277
  %v1286 = vsub.f32 %v1242, %v1277
  %v1287 = vsub.f32 %v1244, %v1277
  %v1288 = vsub.f32 %v1142, %v1278
  %v1289 = vsub.f32 %v1144, %v1278
  %v1290 = vsub.f32 %v1248, %v1278
  %v1291 = vsub.f32 %v1250, %v1278
  %v1292 = vsub.f32 %v1146, %v1279
  %v1293 = vsub.f32 %v1148, %v1279
  %v1294 = vsub.f32 %v1252, %v1279
  %v1295 = vsub.f32 %v1254, %v1279
  %v1296 = vmul.f32 %v1280, %v1280
  %v1297 = vmul.f32 %v1281, %v1281
  %v1298 = vmul.f32 %v1282, %v1282
  %v1299 = vmul.f32 %v1283, %v1283
  %v1300 = vmul.f32 %v1284, %v1284
  %v1301 = vmul.f32 %v1285, %v1285
  %v1302 = vmul.f32 %v1286, %v1286
  %v1303 = vmul.f32 %v1287, %v1287
  %v1304 = vmul.f32 %v1288, %v1288
  %v1305 = vmul.f32 %v1289, %v1289
  %v1306 = vmul.f32 %v1290, %v1290
  %v1307 = vmul.f32 %v1291, %v1291
  %v1308 = vmul.f32 %v1292, %v1292
  %v1309 = vmul.f32 %v1293, %v1293
  %v1310 = vmul.f32 %v1294, %v1294
  %v1311 = vmul.f32 %v1295, %v1295
  %v1312 = vadd.f32 %v1296, %v1297
  %v1313 = vadd.f32 %v1312, %v1298
  %v1314 = vadd.f32 %v1313, %v1299
  %1315 = vadd.xlane.f32.xlu0 %v1314
  %v1316 = vpop.xlane.xlu0 %1315
  %v1317 = vadd.f32 %v1300, %v1301
  %v1318 = vadd.f32 %v1317, %v1302
  %v1319 = vadd.f32 %v1318, %v1303
  %1320 = vadd.xlane.f32.xlu0 %v1319
  %v1321 = vpop.xlane.xlu0 %1320
  %v1322 = vadd.f32 %v1304, %v1305
  %v1323 = vadd.f32 %v1322, %v1306
  %v1324 = vadd.f32 %v1323, %v1307
  %1325 = vadd.xlane.f32.xlu0 %v1324
  %v1326 = vpop.xlane.xlu0 %1325
  %v1327 = vadd.f32 %v1308, %v1309
  %v1328 = vadd.f32 %v1327, %v1310
  %v1329 = vadd.f32 %v1328, %v1311
  %1330 = vadd.xlane.f32.xlu0 %v1329
  %v1331 = vpop.xlane.xlu0 %1330
  %v1332 = vmul.f32 %v1316, 0.001953125
  %v1333 = vmul.f32 %v1321, 0.001953125
  %v1334 = vmul.f32 %v1326, 0.001953125
  %v1335 = vmul.f32 %v1331, 0.001953125
  %v1336 = vld [vmem:[%s3] sm:$0xff]
  %v1337 = vld [vmem:[%s3 + $0x8] sm:$0xff]
  %v1338 = vld [vmem:[%s3 + $0x10] sm:$0xff]
  %v1339 = vld [vmem:[%s3 + $0x18] sm:$0xff]
  %v1340 = vadd.f32 %v1332, 1e-05
  %v1341 = vadd.f32 %v1333, 1e-05
  %v1342 = vadd.f32 %v1334, 1e-05
  %v1343 = vadd.f32 %v1335, 1e-05
  %v1344 = vrsqrt.pop %v1340
  %v1345 = vrsqrt.pop %v1341
  %v1346 = vrsqrt.pop %v1342
  %v1347 = vrsqrt.pop %v1343
  %v1348 = vmul.f32 %v1336, %v1344
  %v1349 = vmul.f32 %v1337, %v1345
  %v1350 = vmul.f32 %v1338, %v1346
  %v1351 = vmul.f32 %v1339, %v1347
  %1353 = vset.pattern.permute.xlu0 0
  %1354 = vperm.xlu0 %1353, %v1348
  %v1355 = vpop.permute.xlu0 %1354
  %1358 = vset.pattern.permute.xlu0 0
  %1359 = vperm.xlu0 %1358, %v1349
  %v1360 = vpop.permute.xlu0 %1359
  %1363 = vset.pattern.permute.xlu0 0
  %1364 = vperm.xlu0 %1363, %v1350
  %v1365 = vpop.permute.xlu0 %1364
  %1368 = vset.pattern.permute.xlu0 0
  %1369 = vperm.xlu0 %1368, %v1351
  %v1370 = vpop.permute.xlu0 %1369
  %v1372 = vmul.f32 %v1280, %v1355
  %v1373 = vmul.f32 %v1281, %v1355
  %v1374 = vmul.f32 %v1282, %v1355
  %v1375 = vmul.f32 %v1283, %v1355
  %v1376 = vmul.f32 %v1284, %v1360
  %v1377 = vmul.f32 %v1285, %v1360
  %v1378 = vmul.f32 %v1286, %v1360
  %v1379 = vmul.f32 %v1287, %v1360
  %v1380 = vmul.f32 %v1288, %v1365
  %v1381 = vmul.f32 %v1289, %v1365
  %v1382 = vmul.f32 %v1290, %v1365
  %v1383 = vmul.f32 %v1291, %v1365
  %v1384 = vmul.f32 %v1292, %v1370
  %v1385 = vmul.f32 %v1293, %v1370
  %v1386 = vmul.f32 %v1294, %v1370
  %v1387 = vmul.f32 %v1295, %v1370
  %v1388 = vld [vmem:[%s4] sm:$0xff]
  %v1389 = vld [vmem:[%s4 + $0x8] sm:$0xff]
  %v1390 = vld [vmem:[%s4 + $0x10] sm:$0xff]
  %v1391 = vld [vmem:[%s4 + $0x18] sm:$0xff]
  %1393 = vset.pattern.permute.xlu0 0
  %1394 = vperm.xlu0 %1393, %v1388
  %v1395 = vpop.permute.xlu0 %1394
  %1398 = vset.pattern.permute.xlu0 0
  %1399 = vperm.xlu0 %1398, %v1389
  %v1400 = vpop.permute.xlu0 %1399
  %1403 = vset.pattern.permute.xlu0 0
  %1404 = vperm.xlu0 %1403, %v1390
  %v1405 = vpop.permute.xlu0 %1404
  %1408 = vset.pattern.permute.xlu0 0
  %1409 = vperm.xlu0 %1408, %v1391
  %v1410 = vpop.permute.xlu0 %1409
  %v1412 = vadd.f32 %v1372, %v1395
  %v1413 = vadd.f32 %v1373, %v1395
  %v1414 = vadd.f32 %v1374, %v1395
  %v1415 = vadd.f32 %v1375, %v1395
  %v1416 = vadd.f32 %v1376, %v1400
  %v1417 = vadd.f32 %v1377, %v1400
  %v1418 = vadd.f32 %v1378, %v1400
  %v1419 = vadd.f32 %v1379, %v1400
  %v1420 = vadd.f32 %v1380, %v1405
  %v1421 = vadd.f32 %v1381, %v1405
  %v1422 = vadd.f32 %v1382, %v1405
  %v1423 = vadd.f32 %v1383, %v1405
  %v1424 = vadd.f32 %v1384, %v1410
  %v1425 = vadd.f32 %v1385, %v1410
  %v1426 = vadd.f32 %v1386, %v1410
  %v1427 = vadd.f32 %v1387, %v1410
  %v1428 = vmax.f32 %v1412, 0.0
  %v1429 = vmax.f32 %v1413, 0.0
  %v1430 = vmax.f32 %v1414, 0.0
  %v1431 = vmax.f32 %v1415, 0.0
  %v1432 = vmax.f32 %v1416, 0.0
  %v1433 = vmax.f32 %v1417, 0.0
  %v1434 = vmax.f32 %v1418, 0.0
  %v1435 = vmax.f32 %v1419, 0.0
  %v1436 = vmax.f32 %v1420, 0.0
  %v1437 = vmax.f32 %v1421, 0.0
  %v1438 = vmax.f32 %v1422, 0.0
  %v1439 = vmax.f32 %v1423, 0.0
  %v1440 = vmax.f32 %v1424, 0.0
  %v1441 = vmax.f32 %v1425, 0.0
  %v1442 = vmax.f32 %v1426, 0.0
  %v1443 = vmax.f32 %v1427, 0.0
  %1444 = vst [vmem:[%s5] sm:$0xff] %v1428
  %1445 = vst [vmem:[%s5 + $0x8] sm:$0xff] %v1429
  %1446 = vst [vmem:[%s5 + $0x10] sm:$0xff] %v1430
  %1447 = vst [vmem:[%s5 + $0x18] sm:$0xff] %v1431
  %1448 = vst [vmem:[%s5 + $0x20] sm:$0xff] %v1432
  %1449 = vst [vmem:[%s5 + $0x28] sm:$0xff] %v1433
  %1450 = vst [vmem:[%s5 + $0x30] sm:$0xff] %v1434
  %1451 = vst [vmem:[%s5 + $0x38] sm:$0xff] %v1435
  %1452 = vst [vmem:[%s5 + $0x40] sm:$0xff] %v1436
  %1453 = vst [vmem:[%s5 + $0x48] sm:$0xff] %v1437
  %1454 = vst [vmem:[%s5 + $0x50] sm:$0xff] %v1438
  %1455 = vst [vmem:[%s5 + $0x58] sm:$0xff] %v1439
  %1456 = vst [vmem:[%s5 + $0x60] sm:$0xff] %v1440
  %1457 = vst [vmem:[%s5 + $0x68] sm:$0xff] %v1441
  %1458 = vst [vmem:[%s5 + $0x70] sm:$0xff] %v1442
  %1459 = vst [vmem:[%s5 + $0x78] sm:$0xff] %v1443
  // Predicated region
  $region22: #{fea_extract_forward.1} parent=0 // pred_check
    _
  $region23: #{fea_extract_forward.1} parent=0 // pred_check_branch
    %1461 = sbr.rel (0) target = $region25
  $region24: #{fea_extract_forward.1} parent=0 // pred_region
    _
  $region25: #{fea_extract_forward.1} parent=0 // pred_fallthru
    _
  // Predicated region
  $region26: #{fea_extract_forward.1} parent=0 // pred_check
    _
  $region27: #{fea_extract_forward.1} parent=0 // pred_check_branch
    %1463 = sbr.rel (0) target = $region29
  $region28: #{fea_extract_forward.1} parent=0 // pred_region
    _
  $region29: #{fea_extract_forward.1} parent=0 // pred_fallthru
    _

</llo_original>
